<compile_context>
chip_gen: v5e
topology: v5e:2x2
jax: 0.10.0
libtpu: 0.0.40
codegen_flags: <defaults>
</compile_context>

<pallas_src>
import jax
import jax.numpy as jnp
from jax.experimental import pallas as pl
from jax.experimental.pallas import tpu as pltpu


def _disc_kernel(x_ref, w1_ref, b1_ref, w2_ref, b2_ref, w3t_ref, b3_ref, o_ref):
    # x_ref : (Bt, H, N) f32 block of the squeezed input.
    x = x_ref[...]
    bt, h, _ = x.shape

    # Batched Gram matrix  A[b] = X[b] X[b]^T  -> (Bt, H, H)  (contract over nodes).
    a = jax.lax.dot_general(
        x, x,
        dimension_numbers=(((2,), (2,)), ((0,), (0,))),
        preferred_element_type=jnp.float32,
    )

    # Row softmax (dim=-1), numerically stable; denominator through the EUP.
    a = a - jnp.max(a, axis=-1, keepdims=True)
    e = jnp.exp(a)
    s = e * pl.reciprocal(jnp.sum(e, axis=-1, keepdims=True), approx=True)   # (Bt, H, H)

    # Flatten to (M, H) with M = Bt*H and run the whole MLP once per block.
    m = bt * h
    s = s.reshape(m, h)

    # L1: H -> 512, LeakyReLU(0.2).  bf16 MXU inputs, f32 accumulate, f32 elementwise.
    h1 = jnp.dot(s.astype(jnp.bfloat16), w1_ref[...],
                 preferred_element_type=jnp.float32) + b1_ref[...]
    h1 = jnp.where(h1 >= 0, h1, 0.2 * h1)

    # L2: 512 -> 256, LeakyReLU(0.2).
    h2 = jnp.dot(h1.astype(jnp.bfloat16), w2_ref[...],
                 preferred_element_type=jnp.float32) + b2_ref[...]
    h2 = jnp.where(h2 >= 0, h2, 0.2 * h2)

    # L3: 256 -> 1 as (1,256) @ (M,256)^T -> lane-dense (1, M) row.
    h3 = jax.lax.dot_general(
        w3t_ref[...], h2.astype(jnp.bfloat16),
        dimension_numbers=(((1,), (1,)), ((), ())),
        preferred_element_type=jnp.float32,
    ) + b3_ref[0, 0]

    # Sigmoid via exp + EUP reciprocal; single lane-dense store.
    o_ref[0] = pl.reciprocal(1.0 + jnp.exp(-h3), approx=True)


def discriminator_temporal(x, params, block_batch=None):
    """x: (B, H, N, 1) float32.  Returns validity of shape (B*H, 1) float32."""
    w1, b1, w2, b2, w3, b3 = params
    xs = jnp.squeeze(x, axis=-1).astype(jnp.float32)     # (B, H, N); safe even if B == 1
    B, H, N = xs.shape
    H1 = w1.shape[1]                                      # 512
    H2 = w2.shape[1]                                      # 256

    # Rows per MLP call = Bt*H.  Target ~256 rows (fills the 256x256 MXU on v6e/v7x,
    # and is a multiple of 128 for v5e when H | 256), never more than the batch.
    if block_batch is None:
        block_batch = max(1, 256 // H) if H < 256 else 1
    Bt = max(1, min(int(block_batch), B))
    num_blocks = (B + Bt - 1) // Bt
    B_pad = num_blocks * Bt
    if B_pad != B:
        # Zero padding: Gram = 0 -> uniform softmax -> finite outputs, dropped below.
        xs = jnp.pad(xs, ((0, B_pad - B), (0, 0), (0, 0)))
    M = Bt * H

    # bf16 weights for the MXU (f32 accumulation inside the kernel); biases stay f32.
    w1b = w1.astype(jnp.bfloat16)
    w2b = w2.astype(jnp.bfloat16)
    w3t = w3.T.astype(jnp.bfloat16)                       # (1, 256) lane-dense row
    b3s = b3.reshape(1, 1).astype(jnp.float32)            # scalar -> SMEM

    out = pl.pallas_call(
        _disc_kernel,
        out_shape=jax.ShapeDtypeStruct((num_blocks, 1, M), jnp.float32),
        grid_spec=pltpu.PrefetchScalarGridSpec(
            num_scalar_prefetch=0,
            grid=(num_blocks,),
            in_specs=[
                pl.BlockSpec((Bt, H, N), lambda i: (i, 0, 0)),          # x block
                pl.BlockSpec((H, H1),    lambda i: (0, 0)),             # w1 (bf16)
                pl.BlockSpec((1, H1),    lambda i: (0, 0)),             # b1 (f32)
                pl.BlockSpec((H1, H2),   lambda i: (0, 0)),             # w2 (bf16)
                pl.BlockSpec((1, H2),    lambda i: (0, 0)),             # b2 (f32)
                pl.BlockSpec((1, H2),    lambda i: (0, 0)),             # w3^T (bf16)
                pl.BlockSpec(memory_space=pltpu.MemorySpace.SMEM),      # b3 scalar
            ],
            out_specs=pl.BlockSpec((1, 1, M), lambda i: (i, 0, 0)),
        ),
        compiler_params=pltpu.CompilerParams(
            dimension_semantics=("parallel",)),             # batch blocks shard across TCs
    )(xs, w1b, b1, w2b, b2, w3t, b3s)

    # (num_blocks, 1, Bt*H) -> (B_pad, H) -> drop padding -> (B*H, 1)
    return out.reshape(B_pad, H)[:B].reshape(B * H, 1)


def init_params(key, horizon):
    """Deterministic Linear params, (in, out) layout, PyTorch-style uniform init."""
    def linear(k, fan_in, fan_out):
        kw, kb = jax.random.split(k)
        bound = 1.0 / jnp.sqrt(fan_in)
        w = jax.random.uniform(kw, (fan_in, fan_out), jnp.float32, -bound, bound)
        b = jax.random.uniform(kb, (1, fan_out), jnp.float32, -bound, bound)
        return w, b

    k1, k2, k3 = jax.random.split(key, 3)
    w1, b1 = linear(k1, horizon, 512)
    w2, b2 = linear(k2, 512, 256)
    w3, b3 = linear(k3, 256, 1)
    return (w1, b1, w2, b2, w3, b3)


def _reference(x, params):
    """Pure-JAX f32 reference of the PyTorch forward for validation."""
    w1, b1, w2, b2, w3, b3 = params
    xs = jnp.squeeze(x, axis=-1)                                 # (B, H, N)
    a = jnp.einsum("bhn,bgn->bhg", xs, xs)                       # (B, H, H)
    a = jax.nn.softmax(a, axis=-1)
    f = a.reshape(-1, a.shape[2])                                # (B*H, H)
    h = f @ w1 + b1
    h = jnp.where(h >= 0, h, 0.2 * h)
    h = h @ w2 + b2
    h = jnp.where(h >= 0, h, 0.2 * h)
    h = h @ w3 + b3
    return jax.nn.sigmoid(h)                                     # (B*H, 1)


if __name__ == "__main__":
    # args.out_steps (horizon) = 8, args.num_nodes = 16
    B, HORIZON, NUM_NODES = 4, 8, 16

    key = jax.random.PRNGKey(0)
    kx, kp = jax.random.split(key)
    x = jax.random.normal(kx, (B, HORIZON, NUM_NODES, 1), jnp.float32)
    params = init_params(kp, HORIZON)

    out = jax.block_until_ready(discriminator_temporal(x, params))
    ref = jax.block_until_ready(_reference(x, params))
    assert out.shape == (B * HORIZON, 1), out.shape
    # bf16 MXU inputs + approx reciprocals -> loosened tolerance vs. the f32 reference.
    assert jnp.allclose(out, ref, atol=2e-2, rtol=0.0), float(jnp.max(jnp.abs(out - ref)))

    # Exercise the multi-block grid + batch-padding path (B=5, Bt=2 -> 3 blocks, 1 pad row).
    B2 = 5
    x2 = jax.random.normal(jax.random.PRNGKey(1), (B2, HORIZON, NUM_NODES, 1), jnp.float32)
    out2 = jax.block_until_ready(discriminator_temporal(x2, params, block_batch=2))
    ref2 = _reference(x2, params)
    assert out2.shape == (B2 * HORIZON, 1), out2.shape
    assert jnp.allclose(out2, ref2, atol=2e-2, rtol=0.0), float(jnp.max(jnp.abs(out2 - ref2)))

    print("KERNEL_OK")
</pallas_src>

<mosaic_0001>
module attributes {stable_mosaic.version = 11 : i64} {
  func.func @_disc_kernel(%arg0: i32, %arg1: memref<4x8x16xf32, #tpu.memory_space<vmem>>, %arg2: memref<8x512xbf16, #tpu.memory_space<vmem>>, %arg3: memref<1x512xf32, #tpu.memory_space<vmem>>, %arg4: memref<512x256xbf16, #tpu.memory_space<vmem>>, %arg5: memref<1x256xf32, #tpu.memory_space<vmem>>, %arg6: memref<1x256xbf16, #tpu.memory_space<vmem>>, %arg7: memref<1x1xf32, #tpu.memory_space<smem>>, %arg8: memref<1x1x32xf32, #tpu.memory_space<vmem>>) attributes {dimension_semantics = [#tpu.dimension_semantics<parallel>], iteration_bounds = array<i64: 1>, scalar_prefetch = 0 : i64, scratch_operands = 0 : i64, tpu.core_type = #tpu.core_type<tc>, window_params = [{transform_indices = @transform_0, window_bounds = array<i64: 4, 8, 16>}, {pipeline_mode = #tpu.pipeline_mode<synchronous>, transform_indices = @transform_1, window_bounds = array<i64: 8, 512>}, {pipeline_mode = #tpu.pipeline_mode<synchronous>, transform_indices = @transform_2, window_bounds = array<i64: 1, 512>}, {pipeline_mode = #tpu.pipeline_mode<synchronous>, transform_indices = @transform_3, window_bounds = array<i64: 512, 256>}, {pipeline_mode = #tpu.pipeline_mode<synchronous>, transform_indices = @transform_4, window_bounds = array<i64: 1, 256>}, {pipeline_mode = #tpu.pipeline_mode<synchronous>, transform_indices = @transform_5, window_bounds = array<i64: 1, 256>}, {transform_indices = @transform_6, window_bounds = array<i64: 1, 1>}, {transform_indices = @transform_7, window_bounds = array<i64: 1, 1, 32>}]} {
    %c0 = arith.constant 0 : index
    %c0_0 = arith.constant 0 : index
    %c0_1 = arith.constant 0 : index
    %0 = vector.load %arg1[%c0, %c0_0, %c0_1] : memref<4x8x16xf32, #tpu.memory_space<vmem>>, vector<4x8x16xf32>
    %cst = arith.constant dense<0.000000e+00> : vector<4x8x8xf32>
    %1 = tpu.matmul %0, %0, %cst {dimension_numbers = #tpu.dot_dimension_numbers<[2], [2], [1], [1], [0, 0, 0, 1, 1, 1], [0], [0]>} : vector<4x8x16xf32>, vector<4x8x16xf32>, vector<4x8x8xf32> -> vector<4x8x8xf32>
    %cst_2 = arith.constant dense<0xFF800000> : vector<4x8xf32>
    %2 = vector.multi_reduction <maximumf>, %1, %cst_2 [2] : vector<4x8x8xf32> to vector<4x8xf32>
    %3 = vector.shape_cast %2 : vector<4x8xf32> to vector<4x8x1xf32>
    %4 = vector.broadcast %3 : vector<4x8x1xf32> to vector<4x8x8xf32>
    %5 = arith.subf %1, %4 : vector<4x8x8xf32>
    %6 = math.exp %5 : vector<4x8x8xf32>
    %cst_3 = arith.constant dense<0.000000e+00> : vector<4x8xf32>
    %7 = vector.multi_reduction <add>, %6, %cst_3 [2] : vector<4x8x8xf32> to vector<4x8xf32>
    %8 = vector.shape_cast %7 : vector<4x8xf32> to vector<4x8x1xf32>
    %9 = tpu.reciprocal %8 {approx = true} : vector<4x8x1xf32> -> vector<4x8x1xf32>
    %10 = vector.broadcast %9 : vector<4x8x1xf32> to vector<4x8x8xf32>
    %11 = arith.mulf %6, %10 : vector<4x8x8xf32>
    %12 = vector.shape_cast %11 : vector<4x8x8xf32> to vector<32x8xf32>
    %13 = arith.truncf %12 : vector<32x8xf32> to vector<32x8xbf16>
    %c0_4 = arith.constant 0 : index
    %c0_5 = arith.constant 0 : index
    %14 = vector.load %arg2[%c0_4, %c0_5] : memref<8x512xbf16, #tpu.memory_space<vmem>>, vector<8x512xbf16>
    %cst_6 = arith.constant dense<0.000000e+00> : vector<32x512xf32>
    %15 = tpu.matmul %13, %14, %cst_6 {dimension_numbers = #tpu.dot_dimension_numbers<[1], [0], [0], [1], [0, 0, 1, 1], [], []>} : vector<32x8xbf16>, vector<8x512xbf16>, vector<32x512xf32> -> vector<32x512xf32>
    %c0_7 = arith.constant 0 : index
    %c0_8 = arith.constant 0 : index
    %16 = vector.load %arg3[%c0_7, %c0_8] : memref<1x512xf32, #tpu.memory_space<vmem>>, vector<1x512xf32>
    %17 = vector.broadcast %16 : vector<1x512xf32> to vector<32x512xf32>
    %18 = arith.addf %15, %17 : vector<32x512xf32>
    %cst_9 = arith.constant 0.000000e+00 : f32
    %19 = vector.broadcast %cst_9 : f32 to vector<32x512xf32>
    %20 = arith.cmpf oge, %18, %19 : vector<32x512xf32>
    %cst_10 = arith.constant 2.000000e-01 : f32
    %21 = vector.broadcast %cst_10 : f32 to vector<32x512xf32>
    %22 = arith.mulf %21, %18 : vector<32x512xf32>
    %23 = arith.select %20, %18, %22 : vector<32x512xi1>, vector<32x512xf32>
    %24 = arith.truncf %23 : vector<32x512xf32> to vector<32x512xbf16>
    %c0_11 = arith.constant 0 : index
    %c0_12 = arith.constant 0 : index
    %25 = vector.load %arg4[%c0_11, %c0_12] : memref<512x256xbf16, #tpu.memory_space<vmem>>, vector<512x256xbf16>
    %cst_13 = arith.constant dense<0.000000e+00> : vector<32x256xf32>
    %26 = tpu.matmul %24, %25, %cst_13 {dimension_numbers = #tpu.dot_dimension_numbers<[1], [0], [0], [1], [0, 0, 1, 1], [], []>} : vector<32x512xbf16>, vector<512x256xbf16>, vector<32x256xf32> -> vector<32x256xf32>
    %c0_14 = arith.constant 0 : index
    %c0_15 = arith.constant 0 : index
    %27 = vector.load %arg5[%c0_14, %c0_15] : memref<1x256xf32, #tpu.memory_space<vmem>>, vector<1x256xf32>
    %28 = vector.broadcast %27 : vector<1x256xf32> to vector<32x256xf32>
    %29 = arith.addf %26, %28 : vector<32x256xf32>
    %cst_16 = arith.constant 0.000000e+00 : f32
    %30 = vector.broadcast %cst_16 : f32 to vector<32x256xf32>
    %31 = arith.cmpf oge, %29, %30 : vector<32x256xf32>
    %cst_17 = arith.constant 2.000000e-01 : f32
    %32 = vector.broadcast %cst_17 : f32 to vector<32x256xf32>
    %33 = arith.mulf %32, %29 : vector<32x256xf32>
    %34 = arith.select %31, %29, %33 : vector<32x256xi1>, vector<32x256xf32>
    %c0_18 = arith.constant 0 : index
    %c0_19 = arith.constant 0 : index
    %35 = vector.load %arg6[%c0_18, %c0_19] : memref<1x256xbf16, #tpu.memory_space<vmem>>, vector<1x256xbf16>
    %36 = arith.truncf %34 : vector<32x256xf32> to vector<32x256xbf16>
    %cst_20 = arith.constant dense<0.000000e+00> : vector<1x32xf32>
    %37 = tpu.matmul %35, %36, %cst_20 {dimension_numbers = #tpu.dot_dimension_numbers<[1], [1], [0], [0], [0, 0, 1, 0], [], []>} : vector<1x256xbf16>, vector<32x256xbf16>, vector<1x32xf32> -> vector<1x32xf32>
    %c0_21 = arith.constant 0 : index
    %c0_22 = arith.constant 0 : index
    %38 = memref.load %arg7[%c0_21, %c0_22] : memref<1x1xf32, #tpu.memory_space<smem>>
    %39 = vector.broadcast %38 : f32 to vector<1x32xf32>
    %40 = arith.addf %37, %39 : vector<1x32xf32>
    %cst_23 = arith.constant 0.000000e+00 : f32
    %41 = vector.broadcast %cst_23 : f32 to vector<1x32xf32>
    %42 = arith.subf %41, %40 : vector<1x32xf32>
    %43 = math.exp %42 : vector<1x32xf32>
    %cst_24 = arith.constant 1.000000e+00 : f32
    %44 = vector.broadcast %cst_24 : f32 to vector<1x32xf32>
    %45 = arith.addf %44, %43 : vector<1x32xf32>
    %46 = tpu.reciprocal %45 {approx = true} : vector<1x32xf32> -> vector<1x32xf32>
    %c0_25 = arith.constant 0 : index
    %c0_26 = arith.constant 0 : index
    %c0_27 = arith.constant 0 : index
    %47 = vector.load %arg8[%c0_25, %c0_26, %c0_27] : memref<1x1x32xf32, #tpu.memory_space<vmem>>, vector<1x1x32xf32>
    %48 = vector.shape_cast %47 : vector<1x1x32xf32> to vector<1x32xf32>
    %49 = vector.shape_cast %46 : vector<1x32xf32> to vector<1x1x32xf32>
    tpu.vector_store %arg8[%c0_25, %c0_26, %c0_27], %49 {strides = array<i32>} : memref<1x1x32xf32, #tpu.memory_space<vmem>>, vector<1x1x32xf32>,
    return
  }
  func.func @transform_0(%arg0: i32) -> (i32, i32, i32) {
    %c0_i32 = arith.constant 0 : i32
    %c0_i32_0 = arith.constant 0 : i32
    %c0_i32_1 = arith.constant 0 : i32
    return %arg0, %c0_i32, %c0_i32_0 : i32, i32, i32
  }
  func.func @transform_1(%arg0: i32) -> (i32, i32) {
    %c0_i32 = arith.constant 0 : i32
    %c0_i32_0 = arith.constant 0 : i32
    %c0_i32_1 = arith.constant 0 : i32
    return %c0_i32, %c0_i32_0 : i32, i32
  }
  func.func @transform_2(%arg0: i32) -> (i32, i32) {
    %c0_i32 = arith.constant 0 : i32
    %c0_i32_0 = arith.constant 0 : i32
    %c0_i32_1 = arith.constant 0 : i32
    return %c0_i32, %c0_i32_0 : i32, i32
  }
  func.func @transform_3(%arg0: i32) -> (i32, i32) {
    %c0_i32 = arith.constant 0 : i32
    %c0_i32_0 = arith.constant 0 : i32
    %c0_i32_1 = arith.constant 0 : i32
    return %c0_i32, %c0_i32_0 : i32, i32
  }
  func.func @transform_4(%arg0: i32) -> (i32, i32) {
    %c0_i32 = arith.constant 0 : i32
    %c0_i32_0 = arith.constant 0 : i32
    %c0_i32_1 = arith.constant 0 : i32
    return %c0_i32, %c0_i32_0 : i32, i32
  }
  func.func @transform_5(%arg0: i32) -> (i32, i32) {
    %c0_i32 = arith.constant 0 : i32
    %c0_i32_0 = arith.constant 0 : i32
    %c0_i32_1 = arith.constant 0 : i32
    return %c0_i32, %c0_i32_0 : i32, i32
  }
  func.func @transform_6(%arg0: i32) -> (i32, i32) {
    %c0_i32 = arith.constant 0 : i32
    %c0_i32_0 = arith.constant 0 : i32
    %c0_i32_1 = arith.constant 0 : i32
    return %c0_i32, %c0_i32_0 : i32, i32
  }
  func.func @transform_7(%arg0: i32) -> (i32, i32, i32) {
    %c0_i32 = arith.constant 0 : i32
    %c0_i32_0 = arith.constant 0 : i32
    %c0_i32_1 = arith.constant 0 : i32
    return %arg0, %c0_i32, %c0_i32_0 : i32, i32, i32
  }
}

</mosaic_0001>

<llo_original>
// kernel: tpu_custom_call.1
$region0: #{tpu_custom_call.1}
  #allocation0 [shape = 'u32[]', space=smem, size = 0x4, offset = 0x4, fixed_abs, tag = 'smem constant byte address 0x4 - core index']
  #allocation1 [shape = 'u32[72,128]{1,0:T(1,128)}', space=vmem, size = 0x9000, scoped, tag = 'internal scratch']
  #allocation2 [shape = 'f32[1,1]{1,0:T(1,128)S(6)}', space=smem, size = 0x200, scoped, tag = 'scoped memory for tpu_custom_call.1']
  %s0 = inlined_call_operand.hbm [shape: f32[4,8,16], index: 0, kind: input, shape index: {}]
  %s1 = inlined_call_operand.hbm [shape: bf16[8,512], index: 1, kind: input, shape index: {}]
  %s2 = inlined_call_operand.hbm [shape: f32[1,512], index: 2, kind: input, shape index: {}]
  %s3 = inlined_call_operand.hbm [shape: bf16[512,256], index: 3, kind: input, shape index: {}]
  %s4 = inlined_call_operand.vmem [shape: f32[1,256], index: 4, kind: input, shape index: {}]
  %s5 = inlined_call_operand.vmem [shape: bf16[1,256], index: 5, kind: input, shape index: {}]
  %s6 = inlined_call_operand.<no memory space> [shape: f32[1,1], index: 6, kind: input, shape index: {}]
  %s7 = inlined_call_operand.hbm [shape: f32[1,1,32], index: 7, kind: output, shape index: {}]
  %s8 = sld [smem:[#allocation0]]
  $region54: #{tpu_custom_call.1} parent=0
    _
  %s10 = ssub.s32 1, %s8
  %s11 = scalar_select 0, %s10, %s8
  %12 = sst [smem:[#allocation2]] %s6
  $region1: #{tpu_custom_call.1} parent=0
    #allocation3 [shape = 'u8[16384]{0}', space=vmem, size = 0x4000, scoped, tag = 'input window, operand 0, single buffered']
    #allocation4 [shape = 's32[1]{0}', space=sflag, size = 0x4, scoped, tag = 'scoped memory for tpu_custom_call.1']
    #allocation5 [shape = 's32[1]{0}', space=sflag, size = 0x4, scoped, tag = 'scoped memory for tpu_custom_call.1']
    #allocation6 [shape = 'u8[8192]{0}', space=vmem, size = 0x2000, scoped, tag = 'input window, operand 1, single buffered']
    #allocation7 [shape = 's32[1]{0}', space=sflag, size = 0x4, scoped, tag = 'scoped memory for tpu_custom_call.1']
    #allocation8 [shape = 'u8[2048]{0}', space=vmem, size = 0x800, scoped, tag = 'input window, operand 2, single buffered']
    #allocation9 [shape = 'u8[262144]{0}', space=vmem, size = 0x40000, scoped, tag = 'input window, operand 3, single buffered']
    #allocation10 [shape = 's32[1]{0}', space=sflag, size = 0x4, scoped, tag = 'scoped memory for tpu_custom_call.1']
    #allocation11 [shape = 'u8[512]{0}', space=vmem, size = 0x400, scoped, tag = 'output window, operand 0, single buffered']
    %13 = vsyncpa [#allocation4], 0
    %14 = vsyncpa [#allocation7], 0
    %15 = vsyncpa [#allocation10], 0
    %16 = vsyncpa [#allocation5], 0
    // Predicated region
    $region2: #{tpu_custom_call.1} parent=1 // pred_check
      _
    $region3: #{tpu_custom_call.1} parent=1 // pred_check_branch
      %18 = sbr.rel (0) target = $region5
    $region4: #{tpu_custom_call.1} parent=1 // pred_region
      %20 = vsyncadd [#allocation4], 0
      %s21 = sshll.u32 %s0, 4
      %s22 = int_to_ptr.hbm [resolvable:$true] %s21
      %s23 = sshll.u32 [#allocation3], 4
      %s24 = int_to_ptr.vmem [resolvable:$true] %s23
      %29 = dma.hbm_to_vmem [thread:$0]  %s22, 512, %s24, [#allocation4], 128, 128, 8
    $region5: #{tpu_custom_call.1} parent=1 // pred_fallthru
      _
    // Predicated region
    $region6: #{tpu_custom_call.1} parent=1 // pred_check
      _
    $region7: #{tpu_custom_call.1} parent=1 // pred_check_branch
      %31 = sbr.rel (0) target = $region9
    $region8: #{tpu_custom_call.1} parent=1 // pred_region
      %33 = vsyncadd [#allocation7], 0
      %s35 = sshll.u32 %s1, 4
      %s36 = int_to_ptr.hbm [resolvable:$true] %s35
      %s37 = sshll.u32 [#allocation6], 4
      %s38 = int_to_ptr.vmem [resolvable:$true] %s37
      %40 = dma.hbm_to_vmem [thread:$0]  %s36, 256, %s38, [#allocation7]
    $region9: #{tpu_custom_call.1} parent=1 // pred_fallthru
      _
    // Predicated region
    $region10: #{tpu_custom_call.1} parent=1 // pred_check
      _
    $region11: #{tpu_custom_call.1} parent=1 // pred_check_branch
      %42 = sbr.rel (0) target = $region13
    $region12: #{tpu_custom_call.1} parent=1 // pred_region
      %44 = vsyncadd [#allocation7], 0
      %s46 = sshll.u32 %s2, 4
      %s47 = int_to_ptr.hbm [resolvable:$true] %s46
      %s48 = sshll.u32 [#allocation8], 4
      %s49 = int_to_ptr.vmem [resolvable:$true] %s48
      %51 = dma.hbm_to_vmem [thread:$0]  %s47, 64, %s49, [#allocation7]
    $region13: #{tpu_custom_call.1} parent=1 // pred_fallthru
      _
    // Predicated region
    $region14: #{tpu_custom_call.1} parent=1 // pred_check
      _
    $region15: #{tpu_custom_call.1} parent=1 // pred_check_branch
      %53 = sbr.rel (0) target = $region17
    $region16: #{tpu_custom_call.1} parent=1 // pred_region
      %55 = vsyncadd [#allocation10], 0
      %s56 = sshll.u32 %s3, 4
      %s57 = int_to_ptr.hbm [resolvable:$true] %s56
      %s58 = sshll.u32 [#allocation9], 4
      %s59 = int_to_ptr.vmem [resolvable:$true] %s58
      %64 = dma.hbm_to_vmem [thread:$0]  %s57, 8192, %s59, [#allocation10], 128, 128, 8
    $region17: #{tpu_custom_call.1} parent=1 // pred_fallthru
      _
    // Predicated region
    $region18: #{tpu_custom_call.1} parent=1 // pred_check
      _
    $region19: #{tpu_custom_call.1} parent=1 // pred_check_branch
      %66 = sbr.rel (0) target = $region21
    $region20: #{tpu_custom_call.1} parent=1 // pred_region
      _
    $region21: #{tpu_custom_call.1} parent=1 // pred_fallthru
      _
    // Predicated region
    $region22: #{tpu_custom_call.1} parent=1 // pred_check
      _
    $region23: #{tpu_custom_call.1} parent=1 // pred_check_branch
      %68 = sbr.rel (0) target = $region25
    $region24: #{tpu_custom_call.1} parent=1 // pred_region
      _
    $region25: #{tpu_custom_call.1} parent=1 // pred_fallthru
      _
    // Predicated region
    $region26: #{tpu_custom_call.1} parent=1 // pred_check
      _
    $region27: #{tpu_custom_call.1} parent=1 // pred_check_branch
      %70 = sbr.rel (0) target = $region29
    $region28: #{tpu_custom_call.1} parent=1 // pred_region
      _
    $region29: #{tpu_custom_call.1} parent=1 // pred_fallthru
      _
    // Predicated region
    $region30: #{tpu_custom_call.1} parent=1 // pred_check
      _
    $region31: #{tpu_custom_call.1} parent=1 // pred_check_branch
      %72 = sbr.rel (0) target = $region33
    $region32: #{tpu_custom_call.1} parent=1 // pred_region
      %74 = dma.done [#allocation4], 512
    $region33: #{tpu_custom_call.1} parent=1 // pred_fallthru
      _
    // Predicated region
    $region34: #{tpu_custom_call.1} parent=1 // pred_check
      _
    $region35: #{tpu_custom_call.1} parent=1 // pred_check_branch
      %76 = sbr.rel (0) target = $region37
    $region36: #{tpu_custom_call.1} parent=1 // pred_region
      %78 = dma.done [#allocation7], 256
    $region37: #{tpu_custom_call.1} parent=1 // pred_fallthru
      _
    // Predicated region
    $region38: #{tpu_custom_call.1} parent=1 // pred_check
      _
    $region39: #{tpu_custom_call.1} parent=1 // pred_check_branch
      %80 = sbr.rel (0) target = $region41
    $region40: #{tpu_custom_call.1} parent=1 // pred_region
      %82 = dma.done [#allocation7], 64
    $region41: #{tpu_custom_call.1} parent=1 // pred_fallthru
      _
    // Predicated region
    $region42: #{tpu_custom_call.1} parent=1 // pred_check
      _
    $region43: #{tpu_custom_call.1} parent=1 // pred_check_branch
      %84 = sbr.rel (0) target = $region45
    $region44: #{tpu_custom_call.1} parent=1 // pred_region
      %86 = dma.done [#allocation10], 8192
    $region45: #{tpu_custom_call.1} parent=1 // pred_fallthru
      _
    %v88 = vld [vmem:[#allocation3] sm:$0xff]
    %v89 = vld [vmem:[#allocation3 + $0x8] sm:$0xff]
    %v90 = vld [vmem:[#allocation3 + $0x10] sm:$0xff]
    %v91 = vld [vmem:[#allocation3 + $0x18] sm:$0xff]
    %vm92 = vcmask 130048
    %v94 = vsel %vm92, %v88, 0
    %96 = vmatpush.xpose.msra.mxu0 0.0
    %97 = vmatpush.xpose.msra.mxu0 0.0
    %98 = vmatpush.xpose.msra.mxu0 0.0
    %99 = vmatpush.xpose.msra.mxu0 0.0
    %100 = vmatpush.xpose.msra.mxu0 0.0
    %101 = vmatpush.xpose.msra.mxu0 0.0
    %102 = vmatpush.xpose.msra.mxu0 0.0
    %103 = vmatpush.xpose.msra.mxu0 0.0
    %104 = vmatpush.xpose.msra.mxu0 0.0
    %105 = vmatpush.xpose.msra.mxu0 0.0
    %106 = vmatpush.xpose.msra.mxu0 0.0
    %107 = vmatpush.xpose.msra.mxu0 0.0
    %108 = vmatpush.xpose.msra.mxu0 0.0
    %109 = vmatpush.xpose.msra.mxu0 0.0
    %110 = vmatpush.xpose.msra.mxu0 0.0
    %111 = vmatpush.xpose.msra.mxu0 %v94
    %112 = vmatmul.f32.gmra.mxu0 %v94
    %v113 = vpop.f32.mrf.mxu0
    %v114 = vadd.f32 0.0, %v113
    %115 = vdwg.mxu0
    %v117 = vsel %vm92, %v89, 0
    %119 = vmatpush.xpose.msra.mxu0 0.0
    %120 = vmatpush.xpose.msra.mxu0 0.0
    %121 = vmatpush.xpose.msra.mxu0 0.0
    %122 = vmatpush.xpose.msra.mxu0 0.0
    %123 = vmatpush.xpose.msra.mxu0 0.0
    %124 = vmatpush.xpose.msra.mxu0 0.0
    %125 = vmatpush.xpose.msra.mxu0 0.0
    %126 = vmatpush.xpose.msra.mxu0 0.0
    %127 = vmatpush.xpose.msra.mxu0 0.0
    %128 = vmatpush.xpose.msra.mxu0 0.0
    %129 = vmatpush.xpose.msra.mxu0 0.0
    %130 = vmatpush.xpose.msra.mxu0 0.0
    %131 = vmatpush.xpose.msra.mxu0 0.0
    %132 = vmatpush.xpose.msra.mxu0 0.0
    %133 = vmatpush.xpose.msra.mxu0 0.0
    %134 = vmatpush.xpose.msra.mxu0 %v117
    %135 = vmatmul.f32.gmra.mxu0 %v117
    %v136 = vpop.f32.mrf.mxu0
    %v137 = vadd.f32 0.0, %v136
    %138 = vdwg.mxu0
    %v140 = vsel %vm92, %v90, 0
    %142 = vmatpush.xpose.msra.mxu0 0.0
    %143 = vmatpush.xpose.msra.mxu0 0.0
    %144 = vmatpush.xpose.msra.mxu0 0.0
    %145 = vmatpush.xpose.msra.mxu0 0.0
    %146 = vmatpush.xpose.msra.mxu0 0.0
    %147 = vmatpush.xpose.msra.mxu0 0.0
    %148 = vmatpush.xpose.msra.mxu0 0.0
    %149 = vmatpush.xpose.msra.mxu0 0.0
    %150 = vmatpush.xpose.msra.mxu0 0.0
    %151 = vmatpush.xpose.msra.mxu0 0.0
    %152 = vmatpush.xpose.msra.mxu0 0.0
    %153 = vmatpush.xpose.msra.mxu0 0.0
    %154 = vmatpush.xpose.msra.mxu0 0.0
    %155 = vmatpush.xpose.msra.mxu0 0.0
    %156 = vmatpush.xpose.msra.mxu0 0.0
    %157 = vmatpush.xpose.msra.mxu0 %v140
    %158 = vmatmul.f32.gmra.mxu0 %v140
    %v159 = vpop.f32.mrf.mxu0
    %v160 = vadd.f32 0.0, %v159
    %161 = vdwg.mxu0
    %v163 = vsel %vm92, %v91, 0
    %165 = vmatpush.xpose.msra.mxu0 0.0
    %166 = vmatpush.xpose.msra.mxu0 0.0
    %167 = vmatpush.xpose.msra.mxu0 0.0
    %168 = vmatpush.xpose.msra.mxu0 0.0
    %169 = vmatpush.xpose.msra.mxu0 0.0
    %170 = vmatpush.xpose.msra.mxu0 0.0
    %171 = vmatpush.xpose.msra.mxu0 0.0
    %172 = vmatpush.xpose.msra.mxu0 0.0
    %173 = vmatpush.xpose.msra.mxu0 0.0
    %174 = vmatpush.xpose.msra.mxu0 0.0
    %175 = vmatpush.xpose.msra.mxu0 0.0
    %176 = vmatpush.xpose.msra.mxu0 0.0
    %177 = vmatpush.xpose.msra.mxu0 0.0
    %178 = vmatpush.xpose.msra.mxu0 0.0
    %179 = vmatpush.xpose.msra.mxu0 0.0
    %180 = vmatpush.xpose.msra.mxu0 %v163
    %181 = vmatmul.f32.gmra.mxu0 %v163
    %v182 = vpop.f32.mrf.mxu0
    %v183 = vadd.f32 0.0, %v182
    %184 = vdwg.mxu0
    %vm185 = vcmask 64512
    %v186 = vsel %vm185, %v114, -inf
    %187 = vmax.xlane.f32.xlu0 %v186
    %v188 = vpop.xlane.xlu0 %187
    %v189 = vsel %vm185, %v137, -inf
    %190 = vmax.xlane.f32.xlu0 %v189
    %v191 = vpop.xlane.xlu0 %190
    %v192 = vsel %vm185, %v160, -inf
    %193 = vmax.xlane.f32.xlu0 %v192
    %v194 = vpop.xlane.xlu0 %193
    %v195 = vsel %vm185, %v183, -inf
    %196 = vmax.xlane.f32.xlu0 %v195
    %v197 = vpop.xlane.xlu0 %196
    %v198 = vsub.f32 %v114, %v188
    %v199 = vsub.f32 %v137, %v191
    %v200 = vsub.f32 %v160, %v194
    %v201 = vsub.f32 %v183, %v197
    %v202 = vmul.f32 %v198, 1.442695
    %v203 = vpow.pop %v202
    %v204 = vmul.f32 %v199, 1.442695
    %v205 = vpow.pop %v204
    %v206 = vmul.f32 %v200, 1.442695
    %v207 = vpow.pop %v206
    %v208 = vmul.f32 %v201, 1.442695
    %v209 = vpow.pop %v208
    %v210 = vsel %vm185, %v203, 0.0
    %211 = vadd.xlane.f32.xlu0 %v210
    %v212 = vpop.xlane.xlu0 %211
    %v213 = vsel %vm185, %v205, 0.0
    %214 = vadd.xlane.f32.xlu0 %v213
    %v215 = vpop.xlane.xlu0 %214
    %v216 = vsel %vm185, %v207, 0.0
    %217 = vadd.xlane.f32.xlu0 %v216
    %v218 = vpop.xlane.xlu0 %217
    %v219 = vsel %vm185, %v209, 0.0
    %220 = vadd.xlane.f32.xlu0 %v219
    %v221 = vpop.xlane.xlu0 %220
    %v222 = vrcp.pop %v212
    %v223 = vrcp.pop %v215
    %v224 = vrcp.pop %v218
    %v225 = vrcp.pop %v221
    %v226 = vmul.f32 %v203, %v222
    %v227 = vmul.f32 %v205, %v223
    %v228 = vmul.f32 %v207, %v224
    %v229 = vmul.f32 %v209, %v225
    %v230 = vpack.c.bf16 %v227, %v226
    %v231 = vpack.c.bf16 %v229, %v228
    %v232 = vld [vmem:[#allocation6] sm:$0xff]
    %v233 = vld [vmem:[#allocation6 + $0x8] sm:$0xff]
    %v234 = vld [vmem:[#allocation8] sm:$0xf]
    %v236 = vperm.slane %v234, 0
    %v237 = vperm.slane %v234, 1
    %v238 = vperm.slane %v234, 2
    %v239 = vperm.slane %v234, 3
    %v246 = vunpack.c.l.b16 %v232
    %v247 = vunpack.c.h.b16 %v232
    %v248 = vunpack.c.l.b16 %v233
    %v249 = vunpack.c.h.b16 %v233
    %v250 = vpack.c.b16 %v246, %v246
    %v251 = vpack.c.b16 %v247, %v247
    %v252 = vpack.c.b16 %v248, %v248
    %v253 = vpack.c.b16 %v249, %v249
    %v255 = vsel %vm185, %v230, 0
    %v258 = vsel %vm185, %v231, 0
    %vm260 = vcmask 1043456
    %v262 = vsel %vm260, %v250, 0
    %v265 = vsel %vm260, %v251, 0
    %v268 = vsel %vm260, %v252, 0
    %v271 = vsel %vm260, %v253, 0
    %273 = vmatpush.bf16.msra.mxu0 0
    %274 = vmatpush.bf16.msra.mxu0 0
    %275 = vmatpush.bf16.msra.mxu0 0
    %276 = vmatpush.bf16.msra.mxu0 0
    %277 = vmatpush.bf16.msra.mxu0 0
    %278 = vmatpush.bf16.msra.mxu0 0
    %279 = vmatpush.bf16.msra.mxu0 0
    %280 = vmatpush.bf16.msra.mxu0 %v262
    %281 = vmatmul.bf16.gmra.mxu0 %v255
    %v282 = vpop.f32.mrf.mxu0
    %v283 = vadd.f32 %v236, %v282
    %v284 = vpop.f32.mrf.mxu0
    %v285 = vadd.f32 %v236, %v284
    %286 = vmatmul.bf16.gmra.mxu0 %v258
    %v287 = vpop.f32.mrf.mxu0
    %v288 = vadd.f32 %v236, %v287
    %v289 = vpop.f32.mrf.mxu0
    %v290 = vadd.f32 %v236, %v289
    %291 = vdwg.mxu0
    %292 = vmatpush.bf16.msra.mxu0 0
    %293 = vmatpush.bf16.msra.mxu0 0
    %294 = vmatpush.bf16.msra.mxu0 0
    %295 = vmatpush.bf16.msra.mxu0 0
    %296 = vmatpush.bf16.msra.mxu0 0
    %297 = vmatpush.bf16.msra.mxu0 0
    %298 = vmatpush.bf16.msra.mxu0 0
    %299 = vmatpush.bf16.msra.mxu0 %v265
    %300 = vmatmul.bf16.gmra.mxu0 %v255
    %v301 = vpop.f32.mrf.mxu0
    %v302 = vadd.f32 %v237, %v301
    %v303 = vpop.f32.mrf.mxu0
    %v304 = vadd.f32 %v237, %v303
    %305 = vmatmul.bf16.gmra.mxu0 %v258
    %v306 = vpop.f32.mrf.mxu0
    %v307 = vadd.f32 %v237, %v306
    %v308 = vpop.f32.mrf.mxu0
    %v309 = vadd.f32 %v237, %v308
    %310 = vdwg.mxu0
    %311 = vmatpush.bf16.msra.mxu0 0
    %312 = vmatpush.bf16.msra.mxu0 0
    %313 = vmatpush.bf16.msra.mxu0 0
    %314 = vmatpush.bf16.msra.mxu0 0
    %315 = vmatpush.bf16.msra.mxu0 0
    %316 = vmatpush.bf16.msra.mxu0 0
    %317 = vmatpush.bf16.msra.mxu0 0
    %318 = vmatpush.bf16.msra.mxu0 %v268
    %319 = vmatmul.bf16.gmra.mxu0 %v255
    %v320 = vpop.f32.mrf.mxu0
    %v321 = vadd.f32 %v238, %v320
    %v322 = vpop.f32.mrf.mxu0
    %v323 = vadd.f32 %v238, %v322
    %324 = vmatmul.bf16.gmra.mxu0 %v258
    %v325 = vpop.f32.mrf.mxu0
    %v326 = vadd.f32 %v238, %v325
    %v327 = vpop.f32.mrf.mxu0
    %v328 = vadd.f32 %v238, %v327
    %329 = vdwg.mxu0
    %330 = vmatpush.bf16.msra.mxu0 0
    %331 = vmatpush.bf16.msra.mxu0 0
    %332 = vmatpush.bf16.msra.mxu0 0
    %333 = vmatpush.bf16.msra.mxu0 0
    %334 = vmatpush.bf16.msra.mxu0 0
    %335 = vmatpush.bf16.msra.mxu0 0
    %336 = vmatpush.bf16.msra.mxu0 0
    %337 = vmatpush.bf16.msra.mxu0 %v271
    %338 = vmatmul.bf16.gmra.mxu0 %v255
    %v339 = vpop.f32.mrf.mxu0
    %v340 = vadd.f32 %v239, %v339
    %v341 = vpop.f32.mrf.mxu0
    %v342 = vadd.f32 %v239, %v341
    %343 = vmatmul.bf16.gmra.mxu0 %v258
    %v344 = vpop.f32.mrf.mxu0
    %v345 = vadd.f32 %v239, %v344
    %v346 = vpop.f32.mrf.mxu0
    %v347 = vadd.f32 %v239, %v346
    %348 = vdwg.mxu0
    %vm349 = vcmp.ge.f32.partialorder %v283, 0.0
    %vm350 = vcmp.ge.f32.partialorder %v302, 0.0
    %vm351 = vcmp.ge.f32.partialorder %v321, 0.0
    %vm352 = vcmp.ge.f32.partialorder %v340, 0.0
    %vm353 = vcmp.ge.f32.partialorder %v285, 0.0
    %vm354 = vcmp.ge.f32.partialorder %v304, 0.0
    %vm355 = vcmp.ge.f32.partialorder %v323, 0.0
    %vm356 = vcmp.ge.f32.partialorder %v342, 0.0
    %vm357 = vcmp.ge.f32.partialorder %v288, 0.0
    %vm358 = vcmp.ge.f32.partialorder %v307, 0.0
    %vm359 = vcmp.ge.f32.partialorder %v326, 0.0
    %vm360 = vcmp.ge.f32.partialorder %v345, 0.0
    %vm361 = vcmp.ge.f32.partialorder %v290, 0.0
    %vm362 = vcmp.ge.f32.partialorder %v309, 0.0
    %vm363 = vcmp.ge.f32.partialorder %v328, 0.0
    %vm364 = vcmp.ge.f32.partialorder %v347, 0.0
    %v365 = vmul.f32 %v283, 0.2
    %v366 = vmul.f32 %v302, 0.2
    %v367 = vmul.f32 %v321, 0.2
    %v368 = vmul.f32 %v340, 0.2
    %v369 = vmul.f32 %v285, 0.2
    %v370 = vmul.f32 %v304, 0.2
    %v371 = vmul.f32 %v323, 0.2
    %v372 = vmul.f32 %v342, 0.2
    %v373 = vmul.f32 %v288, 0.2
    %v374 = vmul.f32 %v307, 0.2
    %v375 = vmul.f32 %v326, 0.2
    %v376 = vmul.f32 %v345, 0.2
    %v377 = vmul.f32 %v290, 0.2
    %v378 = vmul.f32 %v309, 0.2
    %v379 = vmul.f32 %v328, 0.2
    %v380 = vmul.f32 %v347, 0.2
    %v381 = vsel %vm349, %v283, %v365
    %v382 = vsel %vm350, %v302, %v366
    %v383 = vsel %vm351, %v321, %v367
    %v384 = vsel %vm352, %v340, %v368
    %v385 = vsel %vm353, %v285, %v369
    %v386 = vsel %vm354, %v304, %v370
    %v387 = vsel %vm355, %v323, %v371
    %v388 = vsel %vm356, %v342, %v372
    %v389 = vsel %vm357, %v288, %v373
    %v390 = vsel %vm358, %v307, %v374
    %v391 = vsel %vm359, %v326, %v375
    %v392 = vsel %vm360, %v345, %v376
    %v393 = vsel %vm361, %v290, %v377
    %v394 = vsel %vm362, %v309, %v378
    %v395 = vsel %vm363, %v328, %v379
    %v396 = vsel %vm364, %v347, %v380
    %v397 = vpack.c.bf16 %v385, %v381
    %v398 = vpack.c.bf16 %v386, %v382
    %v399 = vpack.c.bf16 %v387, %v383
    %v400 = vpack.c.bf16 %v388, %v384
    %v401 = vpack.c.bf16 %v393, %v389
    %v402 = vpack.c.bf16 %v394, %v390
    %v403 = vpack.c.bf16 %v395, %v391
    %v404 = vpack.c.bf16 %v396, %v392
    %v405 = vld [vmem:[#allocation9] sm:$0xff]
    %v406 = vld [vmem:[#allocation9 + $0x8] sm:$0xff]
    %v407 = vld [vmem:[#allocation9 + $0x10] sm:$0xff]
    %v408 = vld [vmem:[#allocation9 + $0x18] sm:$0xff]
    %v409 = vld [vmem:[#allocation9 + $0x20] sm:$0xff]
    %v410 = vld [vmem:[#allocation9 + $0x28] sm:$0xff]
    %v411 = vld [vmem:[#allocation9 + $0x30] sm:$0xff]
    %v412 = vld [vmem:[#allocation9 + $0x38] sm:$0xff]
    %v413 = vld [vmem:[#allocation9 + $0x40] sm:$0xff]
    %v414 = vld [vmem:[#allocation9 + $0x48] sm:$0xff]
    %v415 = vld [vmem:[#allocation9 + $0x50] sm:$0xff]
    %v416 = vld [vmem:[#allocation9 + $0x58] sm:$0xff]
    %v417 = vld [vmem:[#allocation9 + $0x60] sm:$0xff]
    %v418 = vld [vmem:[#allocation9 + $0x68] sm:$0xff]
    %v419 = vld [vmem:[#allocation9 + $0x70] sm:$0xff]
    %v420 = vld [vmem:[#allocation9 + $0x78] sm:$0xff]
    %v421 = vld [vmem:[#allocation9 + $0x80] sm:$0xff]
    %v422 = vld [vmem:[#allocation9 + $0x88] sm:$0xff]
    %v423 = vld [vmem:[#allocation9 + $0x90] sm:$0xff]
    %v424 = vld [vmem:[#allocation9 + $0x98] sm:$0xff]
    %v425 = vld [vmem:[#allocation9 + $0xa0] sm:$0xff]
    %v426 = vld [vmem:[#allocation9 + $0xa8] sm:$0xff]
    %v427 = vld [vmem:[#allocation9 + $0xb0] sm:$0xff]
    %v428 = vld [vmem:[#allocation9 + $0xb8] sm:$0xff]
    %v429 = vld [vmem:[#allocation9 + $0xc0] sm:$0xff]
    %v430 = vld [vmem:[#allocation9 + $0xc8] sm:$0xff]
    %v431 = vld [vmem:[#allocation9 + $0xd0] sm:$0xff]
    %v432 = vld [vmem:[#allocation9 + $0xd8] sm:$0xff]
    %v433 = vld [vmem:[#allocation9 + $0xe0] sm:$0xff]
    %v434 = vld [vmem:[#allocation9 + $0xe8] sm:$0xff]
    %v435 = vld [vmem:[#allocation9 + $0xf0] sm:$0xff]
    %v436 = vld [vmem:[#allocation9 + $0xf8] sm:$0xff]
    %v437 = vld [vmem:[#allocation9 + $0x100] sm:$0xff]
    %v438 = vld [vmem:[#allocation9 + $0x108] sm:$0xff]
    %v439 = vld [vmem:[#allocation9 + $0x110] sm:$0xff]
    %v440 = vld [vmem:[#allocation9 + $0x118] sm:$0xff]
    %v441 = vld [vmem:[#allocation9 + $0x120] sm:$0xff]
    %v442 = vld [vmem:[#allocation9 + $0x128] sm:$0xff]
    %v443 = vld [vmem:[#allocation9 + $0x130] sm:$0xff]
    %v444 = vld [vmem:[#allocation9 + $0x138] sm:$0xff]
    %v445 = vld [vmem:[#allocation9 + $0x140] sm:$0xff]
    %v446 = vld [vmem:[#allocation9 + $0x148] sm:$0xff]
    %v447 = vld [vmem:[#allocation9 + $0x150] sm:$0xff]
    %v448 = vld [vmem:[#allocation9 + $0x158] sm:$0xff]
    %v449 = vld [vmem:[#allocation9 + $0x160] sm:$0xff]
    %v450 = vld [vmem:[#allocation9 + $0x168] sm:$0xff]
    %v451 = vld [vmem:[#allocation9 + $0x170] sm:$0xff]
    %v452 = vld [vmem:[#allocation9 + $0x178] sm:$0xff]
    %v453 = vld [vmem:[#allocation9 + $0x180] sm:$0xff]
    %v454 = vld [vmem:[#allocation9 + $0x188] sm:$0xff]
    %v455 = vld [vmem:[#allocation9 + $0x190] sm:$0xff]
    %v456 = vld [vmem:[#allocation9 + $0x198] sm:$0xff]
    %v457 = vld [vmem:[#allocation9 + $0x1a0] sm:$0xff]
    %v458 = vld [vmem:[#allocation9 + $0x1a8] sm:$0xff]
    %v459 = vld [vmem:[#allocation9 + $0x1b0] sm:$0xff]
    %v460 = vld [vmem:[#allocation9 + $0x1b8] sm:$0xff]
    %v461 = vld [vmem:[#allocation9 + $0x1c0] sm:$0xff]
    %v462 = vld [vmem:[#allocation9 + $0x1c8] sm:$0xff]
    %v463 = vld [vmem:[#allocation9 + $0x1d0] sm:$0xff]
    %v464 = vld [vmem:[#allocation9 + $0x1d8] sm:$0xff]
    %v465 = vld [vmem:[#allocation9 + $0x1e0] sm:$0xff]
    %v466 = vld [vmem:[#allocation9 + $0x1e8] sm:$0xff]
    %v467 = vld [vmem:[#allocation9 + $0x1f0] sm:$0xff]
    %v468 = vld [vmem:[#allocation9 + $0x1f8] sm:$0xff]
    %v469 = vld [vmem:[%s4] sm:$0x3]
    %v471 = vperm.slane %v469, 0
    %v472 = vperm.slane %v469, 1
    %v539 = vunpack.c.l.b16 %v405
    %v540 = vunpack.c.h.b16 %v405
    %v541 = vunpack.c.l.b16 %v406
    %v542 = vunpack.c.h.b16 %v406
    %v543 = vunpack.c.l.b16 %v407
    %v544 = vunpack.c.h.b16 %v407
    %v545 = vunpack.c.l.b16 %v408
    %v546 = vunpack.c.h.b16 %v408
    %v547 = vunpack.c.l.b16 %v409
    %v548 = vunpack.c.h.b16 %v409
    %v549 = vunpack.c.l.b16 %v410
    %v550 = vunpack.c.h.b16 %v410
    %v551 = vunpack.c.l.b16 %v411
    %v552 = vunpack.c.h.b16 %v411
    %v553 = vunpack.c.l.b16 %v412
    %v554 = vunpack.c.h.b16 %v412
    %v555 = vunpack.c.l.b16 %v413
    %v556 = vunpack.c.h.b16 %v413
    %v557 = vunpack.c.l.b16 %v414
    %v558 = vunpack.c.h.b16 %v414
    %v559 = vunpack.c.l.b16 %v415
    %v560 = vunpack.c.h.b16 %v415
    %v561 = vunpack.c.l.b16 %v416
    %v562 = vunpack.c.h.b16 %v416
    %v563 = vunpack.c.l.b16 %v417
    %v564 = vunpack.c.h.b16 %v417
    %v565 = vunpack.c.l.b16 %v418
    %v566 = vunpack.c.h.b16 %v418
    %v567 = vunpack.c.l.b16 %v419
    %v568 = vunpack.c.h.b16 %v419
    %v569 = vunpack.c.l.b16 %v420
    %v570 = vunpack.c.h.b16 %v420
    %v571 = vunpack.c.l.b16 %v421
    %v572 = vunpack.c.h.b16 %v421
    %v573 = vunpack.c.l.b16 %v422
    %v574 = vunpack.c.h.b16 %v422
    %v575 = vunpack.c.l.b16 %v423
    %v576 = vunpack.c.h.b16 %v423
    %v577 = vunpack.c.l.b16 %v424
    %v578 = vunpack.c.h.b16 %v424
    %v579 = vunpack.c.l.b16 %v425
    %v580 = vunpack.c.h.b16 %v425
    %v581 = vunpack.c.l.b16 %v426
    %v582 = vunpack.c.h.b16 %v426
    %v583 = vunpack.c.l.b16 %v427
    %v584 = vunpack.c.h.b16 %v427
    %v585 = vunpack.c.l.b16 %v428
    %v586 = vunpack.c.h.b16 %v428
    %v587 = vunpack.c.l.b16 %v429
    %v588 = vunpack.c.h.b16 %v429
    %v589 = vunpack.c.l.b16 %v430
    %v590 = vunpack.c.h.b16 %v430
    %v591 = vunpack.c.l.b16 %v431
    %v592 = vunpack.c.h.b16 %v431
    %v593 = vunpack.c.l.b16 %v432
    %v594 = vunpack.c.h.b16 %v432
    %v595 = vunpack.c.l.b16 %v433
    %v596 = vunpack.c.h.b16 %v433
    %v597 = vunpack.c.l.b16 %v434
    %v598 = vunpack.c.h.b16 %v434
    %v599 = vunpack.c.l.b16 %v435
    %v600 = vunpack.c.h.b16 %v435
    %v601 = vunpack.c.l.b16 %v436
    %v602 = vunpack.c.h.b16 %v436
    %v603 = vunpack.c.l.b16 %v437
    %v604 = vunpack.c.h.b16 %v437
    %v605 = vunpack.c.l.b16 %v438
    %v606 = vunpack.c.h.b16 %v438
    %v607 = vunpack.c.l.b16 %v439
    %v608 = vunpack.c.h.b16 %v439
    %v609 = vunpack.c.l.b16 %v440
    %v610 = vunpack.c.h.b16 %v440
    %v611 = vunpack.c.l.b16 %v441
    %v612 = vunpack.c.h.b16 %v441
    %v613 = vunpack.c.l.b16 %v442
    %v614 = vunpack.c.h.b16 %v442
    %v615 = vunpack.c.l.b16 %v443
    %v616 = vunpack.c.h.b16 %v443
    %v617 = vunpack.c.l.b16 %v444
    %v618 = vunpack.c.h.b16 %v444
    %v619 = vunpack.c.l.b16 %v445
    %v620 = vunpack.c.h.b16 %v445
    %v621 = vunpack.c.l.b16 %v446
    %v622 = vunpack.c.h.b16 %v446
    %v623 = vunpack.c.l.b16 %v447
    %v624 = vunpack.c.h.b16 %v447
    %v625 = vunpack.c.l.b16 %v448
    %v626 = vunpack.c.h.b16 %v448
    %v627 = vunpack.c.l.b16 %v449
    %v628 = vunpack.c.h.b16 %v449
    %v629 = vunpack.c.l.b16 %v450
    %v630 = vunpack.c.h.b16 %v450
    %v631 = vunpack.c.l.b16 %v451
    %v632 = vunpack.c.h.b16 %v451
    %v633 = vunpack.c.l.b16 %v452
    %v634 = vunpack.c.h.b16 %v452
    %v635 = vunpack.c.l.b16 %v453
    %v636 = vunpack.c.h.b16 %v453
    %v637 = vunpack.c.l.b16 %v454
    %v638 = vunpack.c.h.b16 %v454
    %v639 = vunpack.c.l.b16 %v455
    %v640 = vunpack.c.h.b16 %v455
    %v641 = vunpack.c.l.b16 %v456
    %v642 = vunpack.c.h.b16 %v456
    %v643 = vunpack.c.l.b16 %v457
    %v644 = vunpack.c.h.b16 %v457
    %v645 = vunpack.c.l.b16 %v458
    %v646 = vunpack.c.h.b16 %v458
    %v647 = vunpack.c.l.b16 %v459
    %v648 = vunpack.c.h.b16 %v459
    %v649 = vunpack.c.l.b16 %v460
    %v650 = vunpack.c.h.b16 %v460
    %v651 = vunpack.c.l.b16 %v461
    %v652 = vunpack.c.h.b16 %v461
    %v653 = vunpack.c.l.b16 %v462
    %v654 = vunpack.c.h.b16 %v462
    %v655 = vunpack.c.l.b16 %v463
    %v656 = vunpack.c.h.b16 %v463
    %v657 = vunpack.c.l.b16 %v464
    %v658 = vunpack.c.h.b16 %v464
    %v659 = vunpack.c.l.b16 %v465
    %v660 = vunpack.c.h.b16 %v465
    %v661 = vunpack.c.l.b16 %v466
    %v662 = vunpack.c.h.b16 %v466
    %v663 = vunpack.c.l.b16 %v467
    %v664 = vunpack.c.h.b16 %v467
    %v665 = vunpack.c.l.b16 %v468
    %v666 = vunpack.c.h.b16 %v468
    %v667 = vpack.c.b16 %v541, %v539
    %v668 = vpack.c.b16 %v542, %v540
    %v669 = vpack.c.b16 %v545, %v543
    %v670 = vpack.c.b16 %v546, %v544
    %v671 = vpack.c.b16 %v549, %v547
    %v672 = vpack.c.b16 %v550, %v548
    %v673 = vpack.c.b16 %v553, %v551
    %v674 = vpack.c.b16 %v554, %v552
    %v675 = vpack.c.b16 %v557, %v555
    %v676 = vpack.c.b16 %v558, %v556
    %v677 = vpack.c.b16 %v561, %v559
    %v678 = vpack.c.b16 %v562, %v560
    %v679 = vpack.c.b16 %v565, %v563
    %v680 = vpack.c.b16 %v566, %v564
    %v681 = vpack.c.b16 %v569, %v567
    %v682 = vpack.c.b16 %v570, %v568
    %v683 = vpack.c.b16 %v573, %v571
    %v684 = vpack.c.b16 %v574, %v572
    %v685 = vpack.c.b16 %v577, %v575
    %v686 = vpack.c.b16 %v578, %v576
    %v687 = vpack.c.b16 %v581, %v579
    %v688 = vpack.c.b16 %v582, %v580
    %v689 = vpack.c.b16 %v585, %v583
    %v690 = vpack.c.b16 %v586, %v584
    %v691 = vpack.c.b16 %v589, %v587
    %v692 = vpack.c.b16 %v590, %v588
    %v693 = vpack.c.b16 %v593, %v591
    %v694 = vpack.c.b16 %v594, %v592
    %v695 = vpack.c.b16 %v597, %v595
    %v696 = vpack.c.b16 %v598, %v596
    %v697 = vpack.c.b16 %v601, %v599
    %v698 = vpack.c.b16 %v602, %v600
    %v699 = vpack.c.b16 %v605, %v603
    %v700 = vpack.c.b16 %v606, %v604
    %v701 = vpack.c.b16 %v609, %v607
    %v702 = vpack.c.b16 %v610, %v608
    %v703 = vpack.c.b16 %v613, %v611
    %v704 = vpack.c.b16 %v614, %v612
    %v705 = vpack.c.b16 %v617, %v615
    %v706 = vpack.c.b16 %v618, %v616
    %v707 = vpack.c.b16 %v621, %v619
    %v708 = vpack.c.b16 %v622, %v620
    %v709 = vpack.c.b16 %v625, %v623
    %v710 = vpack.c.b16 %v626, %v624
    %v711 = vpack.c.b16 %v629, %v627
    %v712 = vpack.c.b16 %v630, %v628
    %v713 = vpack.c.b16 %v633, %v631
    %v714 = vpack.c.b16 %v634, %v632
    %v715 = vpack.c.b16 %v637, %v635
    %v716 = vpack.c.b16 %v638, %v636
    %v717 = vpack.c.b16 %v641, %v639
    %v718 = vpack.c.b16 %v642, %v640
    %v719 = vpack.c.b16 %v645, %v643
    %v720 = vpack.c.b16 %v646, %v644
    %v721 = vpack.c.b16 %v649, %v647
    %v722 = vpack.c.b16 %v650, %v648
    %v723 = vpack.c.b16 %v653, %v651
    %v724 = vpack.c.b16 %v654, %v652
    %v725 = vpack.c.b16 %v657, %v655
    %v726 = vpack.c.b16 %v658, %v656
    %v727 = vpack.c.b16 %v661, %v659
    %v728 = vpack.c.b16 %v662, %v660
    %v729 = vpack.c.b16 %v665, %v663
    %v730 = vpack.c.b16 %v666, %v664
    %795 = vmatpush.bf16.msra.mxu0 %v681
    %796 = vmatpush.bf16.msra.mxu0 %v679
    %797 = vmatpush.bf16.msra.mxu0 %v677
    %798 = vmatpush.bf16.msra.mxu0 %v675
    %799 = vmatpush.bf16.msra.mxu0 %v673
    %800 = vmatpush.bf16.msra.mxu0 %v671
    %801 = vmatpush.bf16.msra.mxu0 %v669
    %802 = vmatpush.bf16.msra.mxu0 %v667
    %803 = vmatmul.bf16.gmra.mxu0 %v397
    %v804 = vpop.f32.mrf.mxu0
    %v805 = vadd.f32 %v471, %v804
    %v806 = vpop.f32.mrf.mxu0
    %v807 = vadd.f32 %v471, %v806
    %808 = vmatmul.bf16.gmra.mxu0 %v401
    %v809 = vpop.f32.mrf.mxu0
    %v810 = vadd.f32 %v471, %v809
    %v811 = vpop.f32.mrf.mxu0
    %v812 = vadd.f32 %v471, %v811
    %813 = vdwg.mxu0
    %814 = vmatpush.bf16.msra.mxu0 %v697
    %815 = vmatpush.bf16.msra.mxu0 %v695
    %816 = vmatpush.bf16.msra.mxu0 %v693
    %817 = vmatpush.bf16.msra.mxu0 %v691
    %818 = vmatpush.bf16.msra.mxu0 %v689
    %819 = vmatpush.bf16.msra.mxu0 %v687
    %820 = vmatpush.bf16.msra.mxu0 %v685
    %821 = vmatpush.bf16.msra.mxu0 %v683
    %822 = vmatmul.bf16.gmra.mxu0 %v398
    %v823 = vpop.f32.mrf.mxu0
    %v824 = vadd.f32 %v805, %v823
    %v825 = vpop.f32.mrf.mxu0
    %v826 = vadd.f32 %v807, %v825
    %827 = vmatmul.bf16.gmra.mxu0 %v402
    %v828 = vpop.f32.mrf.mxu0
    %v829 = vadd.f32 %v810, %v828
    %v830 = vpop.f32.mrf.mxu0
    %v831 = vadd.f32 %v812, %v830
    %832 = vdwg.mxu0
    %833 = vmatpush.bf16.msra.mxu0 %v713
    %834 = vmatpush.bf16.msra.mxu0 %v711
    %835 = vmatpush.bf16.msra.mxu0 %v709
    %836 = vmatpush.bf16.msra.mxu0 %v707
    %837 = vmatpush.bf16.msra.mxu0 %v705
    %838 = vmatpush.bf16.msra.mxu0 %v703
    %839 = vmatpush.bf16.msra.mxu0 %v701
    %840 = vmatpush.bf16.msra.mxu0 %v699
    %841 = vmatmul.bf16.gmra.mxu0 %v399
    %v842 = vpop.f32.mrf.mxu0
    %v843 = vadd.f32 %v824, %v842
    %v844 = vpop.f32.mrf.mxu0
    %v845 = vadd.f32 %v826, %v844
    %846 = vmatmul.bf16.gmra.mxu0 %v403
    %v847 = vpop.f32.mrf.mxu0
    %v848 = vadd.f32 %v829, %v847
    %v849 = vpop.f32.mrf.mxu0
    %v850 = vadd.f32 %v831, %v849
    %851 = vdwg.mxu0
    %852 = vmatpush.bf16.msra.mxu0 %v729
    %853 = vmatpush.bf16.msra.mxu0 %v727
    %854 = vmatpush.bf16.msra.mxu0 %v725
    %855 = vmatpush.bf16.msra.mxu0 %v723
    %856 = vmatpush.bf16.msra.mxu0 %v721
    %857 = vmatpush.bf16.msra.mxu0 %v719
    %858 = vmatpush.bf16.msra.mxu0 %v717
    %859 = vmatpush.bf16.msra.mxu0 %v715
    %860 = vmatmul.bf16.gmra.mxu0 %v400
    %v861 = vpop.f32.mrf.mxu0
    %v862 = vadd.f32 %v843, %v861
    %v863 = vpop.f32.mrf.mxu0
    %v864 = vadd.f32 %v845, %v863
    %865 = vmatmul.bf16.gmra.mxu0 %v404
    %v866 = vpop.f32.mrf.mxu0
    %v867 = vadd.f32 %v848, %v866
    %v868 = vpop.f32.mrf.mxu0
    %v869 = vadd.f32 %v850, %v868
    %870 = vdwg.mxu0
    %871 = vmatpush.bf16.msra.mxu0 %v682
    %872 = vmatpush.bf16.msra.mxu0 %v680
    %873 = vmatpush.bf16.msra.mxu0 %v678
    %874 = vmatpush.bf16.msra.mxu0 %v676
    %875 = vmatpush.bf16.msra.mxu0 %v674
    %876 = vmatpush.bf16.msra.mxu0 %v672
    %877 = vmatpush.bf16.msra.mxu0 %v670
    %878 = vmatpush.bf16.msra.mxu0 %v668
    %879 = vmatmul.bf16.gmra.mxu0 %v397
    %v880 = vpop.f32.mrf.mxu0
    %v881 = vadd.f32 %v472, %v880
    %v882 = vpop.f32.mrf.mxu0
    %v883 = vadd.f32 %v472, %v882
    %884 = vmatmul.bf16.gmra.mxu0 %v401
    %v885 = vpop.f32.mrf.mxu0
    %v886 = vadd.f32 %v472, %v885
    %v887 = vpop.f32.mrf.mxu0
    %v888 = vadd.f32 %v472, %v887
    %889 = vdwg.mxu0
    %890 = vmatpush.bf16.msra.mxu0 %v698
    %891 = vmatpush.bf16.msra.mxu0 %v696
    %892 = vmatpush.bf16.msra.mxu0 %v694
    %893 = vmatpush.bf16.msra.mxu0 %v692
    %894 = vmatpush.bf16.msra.mxu0 %v690
    %895 = vmatpush.bf16.msra.mxu0 %v688
    %896 = vmatpush.bf16.msra.mxu0 %v686
    %897 = vmatpush.bf16.msra.mxu0 %v684
    %898 = vmatmul.bf16.gmra.mxu0 %v398
    %v899 = vpop.f32.mrf.mxu0
    %v900 = vadd.f32 %v881, %v899
    %v901 = vpop.f32.mrf.mxu0
    %v902 = vadd.f32 %v883, %v901
    %903 = vmatmul.bf16.gmra.mxu0 %v402
    %v904 = vpop.f32.mrf.mxu0
    %v905 = vadd.f32 %v886, %v904
    %v906 = vpop.f32.mrf.mxu0
    %v907 = vadd.f32 %v888, %v906
    %908 = vdwg.mxu0
    %909 = vmatpush.bf16.msra.mxu0 %v714
    %910 = vmatpush.bf16.msra.mxu0 %v712
    %911 = vmatpush.bf16.msra.mxu0 %v710
    %912 = vmatpush.bf16.msra.mxu0 %v708
    %913 = vmatpush.bf16.msra.mxu0 %v706
    %914 = vmatpush.bf16.msra.mxu0 %v704
    %915 = vmatpush.bf16.msra.mxu0 %v702
    %916 = vmatpush.bf16.msra.mxu0 %v700
    %917 = vmatmul.bf16.gmra.mxu0 %v399
    %v918 = vpop.f32.mrf.mxu0
    %v919 = vadd.f32 %v900, %v918
    %v920 = vpop.f32.mrf.mxu0
    %v921 = vadd.f32 %v902, %v920
    %922 = vmatmul.bf16.gmra.mxu0 %v403
    %v923 = vpop.f32.mrf.mxu0
    %v924 = vadd.f32 %v905, %v923
    %v925 = vpop.f32.mrf.mxu0
    %v926 = vadd.f32 %v907, %v925
    %927 = vdwg.mxu0
    %928 = vmatpush.bf16.msra.mxu0 %v730
    %929 = vmatpush.bf16.msra.mxu0 %v728
    %930 = vmatpush.bf16.msra.mxu0 %v726
    %931 = vmatpush.bf16.msra.mxu0 %v724
    %932 = vmatpush.bf16.msra.mxu0 %v722
    %933 = vmatpush.bf16.msra.mxu0 %v720
    %934 = vmatpush.bf16.msra.mxu0 %v718
    %935 = vmatpush.bf16.msra.mxu0 %v716
    %936 = vmatmul.bf16.gmra.mxu0 %v400
    %v937 = vpop.f32.mrf.mxu0
    %v938 = vadd.f32 %v919, %v937
    %v939 = vpop.f32.mrf.mxu0
    %v940 = vadd.f32 %v921, %v939
    %941 = vmatmul.bf16.gmra.mxu0 %v404
    %v942 = vpop.f32.mrf.mxu0
    %v943 = vadd.f32 %v924, %v942
    %v944 = vpop.f32.mrf.mxu0
    %v945 = vadd.f32 %v926, %v944
    %946 = vdwg.mxu0
    %vm947 = vcmp.ge.f32.partialorder %v862, 0.0
    %vm948 = vcmp.ge.f32.partialorder %v938, 0.0
    %vm949 = vcmp.ge.f32.partialorder %v864, 0.0
    %vm950 = vcmp.ge.f32.partialorder %v940, 0.0
    %vm951 = vcmp.ge.f32.partialorder %v867, 0.0
    %vm952 = vcmp.ge.f32.partialorder %v943, 0.0
    %vm953 = vcmp.ge.f32.partialorder %v869, 0.0
    %vm954 = vcmp.ge.f32.partialorder %v945, 0.0
    %v955 = vmul.f32 %v862, 0.2
    %v956 = vmul.f32 %v938, 0.2
    %v957 = vmul.f32 %v864, 0.2
    %v958 = vmul.f32 %v940, 0.2
    %v959 = vmul.f32 %v867, 0.2
    %v960 = vmul.f32 %v943, 0.2
    %v961 = vmul.f32 %v869, 0.2
    %v962 = vmul.f32 %v945, 0.2
    %v963 = vsel %vm947, %v862, %v955
    %v964 = vsel %vm948, %v938, %v956
    %v965 = vsel %vm949, %v864, %v957
    %v966 = vsel %vm950, %v940, %v958
    %v967 = vsel %vm951, %v867, %v959
    %v968 = vsel %vm952, %v943, %v960
    %v969 = vsel %vm953, %v869, %v961
    %v970 = vsel %vm954, %v945, %v962
    %v971 = vld [vmem:[%s5] sm:$0x3]
    %v972 = vpack.c.bf16 %v965, %v963
    %v973 = vpack.c.bf16 %v966, %v964
    %v974 = vpack.c.bf16 %v969, %v967
    %v975 = vpack.c.bf16 %v970, %v968
    %s976 = sld [smem:[#allocation2]]
    %v977 = vstv %s976
    %979 = vst [vmem:[#allocation1] ss:$9 sm:$0xff] %v971
    %v980 = vld [vmem:[#allocation1] sm:$0xff]
    %v981 = vld [vmem:[#allocation1 + $0x9] sm:$0xff]
    %984 = vmatpush.bf16.xpose.msra.mxu0 0
    %985 = vmatpush.bf16.xpose.msra.mxu0 0
    %986 = vmatpush.bf16.xpose.msra.mxu0 0
    %987 = vmatpush.bf16.xpose.msra.mxu0 0
    %988 = vmatpush.bf16.xpose.msra.mxu0 0
    %989 = vmatpush.bf16.xpose.msra.mxu0 0
    %990 = vmatpush.bf16.xpose.msra.mxu0 %v974
    %991 = vmatpush.bf16.xpose.msra.mxu0 %v972
    %992 = vmatmul.bf16.gmra.mxu0 %v980
    %v993 = vpop.f32.mrf.mxu0
    %v994 = vadd.f32 %v977, %v993
    %v995 = vpop.f32.mrf.mxu0
    %996 = vdwg.mxu0
    %997 = vmatpush.bf16.xpose.msra.mxu0 0
    %998 = vmatpush.bf16.xpose.msra.mxu0 0
    %999 = vmatpush.bf16.xpose.msra.mxu0 0
    %1000 = vmatpush.bf16.xpose.msra.mxu0 0
    %1001 = vmatpush.bf16.xpose.msra.mxu0 0
    %1002 = vmatpush.bf16.xpose.msra.mxu0 0
    %1003 = vmatpush.bf16.xpose.msra.mxu0 %v975
    %1004 = vmatpush.bf16.xpose.msra.mxu0 %v973
    %1005 = vmatmul.bf16.gmra.mxu0 %v981
    %v1006 = vpop.f32.mrf.mxu0
    %v1007 = vadd.f32 %v994, %v1006
    %v1008 = vpop.f32.mrf.mxu0
    %1009 = vdwg.mxu0
    %v1010 = vsub.f32 0.0, %v1007
    %v1011 = vmul.f32 %v1010, 1.442695
    %v1012 = vpow.pop %v1011
    %v1013 = vadd.f32 %v1012, 1.0
    %v1014 = vrcp.pop %v1013
    %vm1015 = vcmask 253952
    %1016 = vst.msk [vmem:[#allocation11] sm:$0x1] %vm1015, %v1014
    // Predicated region
    $region46: #{tpu_custom_call.1} parent=1 // pred_check
      _
    $region47: #{tpu_custom_call.1} parent=1 // pred_check_branch
      %1018 = sbr.rel (0) target = $region49
    $region48: #{tpu_custom_call.1} parent=1 // pred_region
      %1020 = vsyncadd [#allocation5], 0
      %s1022 = sshll.u32 [#allocation11], 4
      %s1023 = int_to_ptr.vmem [resolvable:$true] %s1022
      %s1024 = sshll.u32 %s7, 4
      %s1025 = int_to_ptr.hbm [resolvable:$true] %s1024
      %1027 = dma.vmem_to_hbm [thread:$0]  %s1023, 16, %s1025, [#allocation5]
    $region49: #{tpu_custom_call.1} parent=1 // pred_fallthru
      _
    // Predicated region
    $region50: #{tpu_custom_call.1} parent=1 // pred_check
      _
    $region51: #{tpu_custom_call.1} parent=1 // pred_check_branch
      %1029 = sbr.rel (0) target = $region53
    $region52: #{tpu_custom_call.1} parent=1 // pred_region
      %1031 = dma.done [#allocation5], 16
    $region53: #{tpu_custom_call.1} parent=1 // pred_fallthru
      _
    %1032 = vsyncpa [#allocation4], 1
    %1033 = vsyncpa [#allocation7], 1
    %1034 = vsyncpa [#allocation10], 1
    %1035 = vsyncpa [#allocation5], 1

</llo_original>
